<compile_context>
chip_gen: v7x
topology: tpu7x:2x2x1
jax: 0.10.0
libtpu: 0.0.40
codegen_flags: <defaults>
</compile_context>

<pallas_src>
import jax
import jax.numpy as jnp
from jax.experimental import pallas as pl
from jax.experimental.pallas import tpu as pltpu


# ----------------------------------------------------------------------------- #
# Kernel
# ----------------------------------------------------------------------------- #
def _fused_embedding_kernel(dyn_ref, meta_ref, wd_ref, wm_ref, b_ref, out_ref):
    """One (row-block, time-chunk) step.

    dyn_ref:  (Rb, Tc*Cd)        flattened dynamic features for this time chunk
    meta_ref: (Rb, Cm)           metadata features (same for every chunk)
    wd_ref:   (Tc*Cd, Tc*dm)     block-diagonal dyn weight (norm folded in)
    wm_ref:   (Cm,    Tc*dm)     column-tiled metadata weight (norm folded in)
    b_ref:    (1,     Tc*dm)     fused bias
    out_ref:  (Rb,    Tc*dm)     lane-dense output slab for this chunk
    """
    y = jnp.dot(dyn_ref[...], wd_ref[...], preferred_element_type=jnp.float32)
    y = y + jnp.dot(meta_ref[...], wm_ref[...], preferred_element_type=jnp.float32)
    out_ref[...] = (y + b_ref[...]).astype(out_ref.dtype)


# ----------------------------------------------------------------------------- #
# One-time parameter preprocessing
# ----------------------------------------------------------------------------- #
def _choose_time_chunk(T, Cd, Cm, d_model, max_weight_bytes=4 << 20):
    """Largest legal time chunk Tc (divisor of T) whose weight tile fits budget.

    Legality: either Tc == T (blocks equal full array extent) or both Tc*Cd and
    Tc*d_model are multiples of 128 (lane rule for non-full blocks).
    """
    full_bytes = (T * Cd + Cm) * (T * d_model) * 4
    if full_bytes <= max_weight_bytes:
        return T
    best = None
    for Tc in range(1, T):
        if T % Tc:
            continue
        if (Tc * Cd) % 128 or (Tc * d_model) % 128:
            continue
        if (Tc * Cd + Cm) * (Tc * d_model) * 4 <= max_weight_bytes:
            best = Tc
    return best if best is not None else T


def prepare_fused_params(params, T):
    """Fold normalization into the Linears and build chunk-sized fused weights.

    Returns (w_dyn, w_meta, b_chunk, d_model, Tc):
      w_dyn:   [Tc*Cd, Tc*d_model]  block-diagonal per-time dyn weight
      w_meta:  [Cm,    Tc*d_model]  metadata weight tiled into every time slot
      b_chunk: [1,     Tc*d_model]  fused bias, repeated per time step
    The same tiles serve every time chunk (block-diagonal structure repeats).
    """
    wd, bd = params["wd"], params["bd"]                  # [Cd, dyn_n], [1, dyn_n]
    wm, bm = params["wm"], params["bm"]                  # [Cm, meta_n], [1, meta_n]
    dyn_mean, dyn_std = params["dyn_mean"], params["dyn_std"]      # [1, Cd]
    meta_mean, meta_std = params["meta_mean"], params["meta_std"]  # [1, Cm]

    Cd, dyn_n = wd.shape
    Cm, meta_n = wm.shape
    d_model = dyn_n + meta_n

    # TODO(synk): exact InputNormalization cfg semantics not available; standard
    #             per-feature (x - mean) / std normalization is assumed.
    # Exact fold (f32):  ((x-m)/s) @ W + b == x @ (W/s) + (b - (m/s) @ W)
    wd_f = wd / dyn_std[0][:, None]
    bd_f = bd - (dyn_mean / dyn_std) @ wd
    wm_f = wm / meta_std[0][:, None]
    bm_f = bm - (meta_mean / meta_std) @ wm

    Tc = _choose_time_chunk(T, Cd, Cm, d_model)
    Nc = Tc * d_model

    w_dyn = jnp.zeros((Tc * Cd, Nc), jnp.float32)
    w_meta = jnp.zeros((Cm, Nc), jnp.float32)
    for t in range(Tc):
        w_dyn = w_dyn.at[t * Cd:(t + 1) * Cd,
                         t * d_model:t * d_model + dyn_n].set(wd_f)
        w_meta = w_meta.at[:, t * d_model + dyn_n:(t + 1) * d_model].set(wm_f)
    b_chunk = jnp.tile(jnp.concatenate([bd_f, bm_f], axis=-1), (1, Tc))  # [1, Nc]

    return w_dyn, w_meta, b_chunk, d_model, Tc


# ----------------------------------------------------------------------------- #
# Wrapper
# ----------------------------------------------------------------------------- #
def _pick_row_block(B):
    """(padded_B, row_block): full-extent for tiny batches, otherwise multiples
    of 8 sublanes, <= 256 rows per MXU push, and >= 2 row steps once B >= 128 so
    both v7x TensorCores get work."""
    if B <= 8:
        return B, B
    pad_B = -(-B // 8) * 8
    cap = 256
    if pad_B >= 128:
        cap = min(cap, max(64, (pad_B // 2 // 8) * 8))
    Rb = (min(cap, pad_B) // 8) * 8
    while pad_B % Rb:
        Rb -= 8
    return pad_B, Rb


def input_embedding(dynamic_data, metadata, fused, out_dtype=jnp.float32):
    """dynamic_data: [B, T, Cd] f32; metadata: [B, Cm] f32 -> [B, T, d_model]."""
    w_dyn, w_meta, b_chunk, d_model, Tc = fused
    B, T, Cd = dynamic_data.shape
    Cm = metadata.shape[-1]
    assert T % Tc == 0
    Nc = Tc * d_model
    N = T * d_model
    assert w_dyn.shape == (Tc * Cd, Nc)
    assert w_meta.shape == (Cm, Nc)
    assert b_chunk.shape == (1, Nc)

    # Free (row-major) reshape so the kernel sees a 2-D LHS.
    dyn2d = dynamic_data.reshape(B, T * Cd)

    pad_B, Rb = _pick_row_block(B)
    if pad_B != B:
        dyn2d = jnp.pad(dyn2d, ((0, pad_B - B), (0, 0)))
        metadata = jnp.pad(metadata, ((0, pad_B - B), (0, 0)))

    grid = (pad_B // Rb, T // Tc)

    out2d = pl.pallas_call(
        _fused_embedding_kernel,
        out_shape=jax.ShapeDtypeStruct((pad_B, N), out_dtype),
        grid_spec=pltpu.PrefetchScalarGridSpec(
            num_scalar_prefetch=0,
            grid=grid,
            in_specs=[
                pl.BlockSpec((Rb, Tc * Cd), lambda r, c: (r, c)),   # dyn chunk
                pl.BlockSpec((Rb, Cm), lambda r, c: (r, 0)),        # metadata
                pl.BlockSpec((Tc * Cd, Nc), lambda r, c: (0, 0)),   # W_dyn (resident)
                pl.BlockSpec((Cm, Nc), lambda r, c: (0, 0)),        # W_meta (resident)
                pl.BlockSpec((1, Nc), lambda r, c: (0, 0)),         # bias (resident)
            ],
            out_specs=pl.BlockSpec((Rb, Nc), lambda r, c: (r, c)),  # lane-dense slab
        ),
        compiler_params=pltpu.CompilerParams(
            dimension_semantics=("parallel", "parallel")),
    )(dyn2d, metadata, w_dyn, w_meta, b_chunk)

    # Drop batch padding; free row-major reshape back to module output layout.
    return out2d[:B].reshape(B, T, d_model)


# ----------------------------------------------------------------------------- #
# Pure-JAX reference (follows the torch module step by step)
# ----------------------------------------------------------------------------- #
def _reference(dynamic_data, metadata, params):
    dyn_norm = (dynamic_data - params["dyn_mean"][0]) / params["dyn_std"][0]
    meta_norm = (metadata - params["meta_mean"][0]) / params["meta_std"][0]
    dyn_emb = dyn_norm @ params["wd"] + params["bd"][0]
    meta_emb = meta_norm @ params["wm"] + params["bm"][0]
    T = dynamic_data.shape[1]
    meta_emb = jnp.broadcast_to(meta_emb[:, None, :],
                                (meta_emb.shape[0], T, meta_emb.shape[-1]))
    return jnp.concatenate([dyn_emb, meta_emb], axis=-1)


if __name__ == "__main__":
    # Shapes consistent with the module's forward contract:
    #   dynamic_data: [B, T, 4], metadata: [B, 2], d_model=32, metadata_n_features=8
    B, T = 2, 8
    dynamic_input_size = 4
    metadata_input_size = 2
    d_model = 32
    metadata_n_features = 8
    dynamic_n_features = d_model - metadata_n_features  # 24

    key = jax.random.PRNGKey(0)
    k = jax.random.split(key, 8)

    dynamic_data = jax.random.normal(k[0], (B, T, dynamic_input_size), jnp.float32)
    metadata = jax.random.normal(k[1], (B, metadata_input_size), jnp.float32)

    params = {
        # normalization parameters (deterministic, synthetic)
        "dyn_mean": jax.random.normal(k[2], (1, dynamic_input_size), jnp.float32) * 0.1,
        "dyn_std": jnp.abs(jax.random.normal(k[3], (1, dynamic_input_size), jnp.float32)) + 0.5,
        "meta_mean": jax.random.normal(k[4], (1, metadata_input_size), jnp.float32) * 0.1,
        "meta_std": jnp.abs(jax.random.normal(k[5], (1, metadata_input_size), jnp.float32)) + 0.5,
        # Linear weights, stored as [in, out] (transposed from torch's [out, in])
        "wd": jax.random.normal(k[6], (dynamic_input_size, dynamic_n_features),
                                jnp.float32) * 0.1,
        "bd": jnp.linspace(-0.1, 0.1, dynamic_n_features,
                           dtype=jnp.float32).reshape(1, -1),
        "wm": jax.random.normal(k[7], (metadata_input_size, metadata_n_features),
                                jnp.float32) * 0.1,
        "bm": jnp.linspace(-0.05, 0.05, metadata_n_features,
                           dtype=jnp.float32).reshape(1, -1),
    }

    # One-time parameter preprocessing (fold normalization, build split fused weights).
    fused = prepare_fused_params(params, T)
    assert fused[3] == d_model

    out = input_embedding(dynamic_data, metadata, fused)
    out = jax.block_until_ready(out)

    ref = _reference(dynamic_data, metadata, params)
    assert out.shape == (B, T, d_model), out.shape
    assert jnp.allclose(out, ref, atol=2e-5, rtol=2e-5), "mismatch vs reference"

    print("KERNEL_OK")
</pallas_src>

<mosaic_0001>
module attributes {stable_mosaic.version = 11 : i64} {
  func.func @_fused_embedding_kernel(%arg0: i32, %arg1: i32, %arg2: memref<2x32xf32, #tpu.memory_space<vmem>>, %arg3: memref<2x2xf32, #tpu.memory_space<vmem>>, %arg4: memref<32x256xf32, #tpu.memory_space<vmem>>, %arg5: memref<2x256xf32, #tpu.memory_space<vmem>>, %arg6: memref<1x256xf32, #tpu.memory_space<vmem>>, %arg7: memref<2x256xf32, #tpu.memory_space<vmem>>) attributes {dimension_semantics = [#tpu.dimension_semantics<parallel>, #tpu.dimension_semantics<parallel>], iteration_bounds = array<i64: 1, 1>, scalar_prefetch = 0 : i64, scratch_operands = 0 : i64, tpu.core_type = #tpu.core_type<tc>, window_params = [{transform_indices = @transform_0, window_bounds = array<i64: 2, 32>}, {transform_indices = @transform_1, window_bounds = array<i64: 2, 2>}, {pipeline_mode = #tpu.pipeline_mode<synchronous>, transform_indices = @transform_2, window_bounds = array<i64: 32, 256>}, {pipeline_mode = #tpu.pipeline_mode<synchronous>, transform_indices = @transform_3, window_bounds = array<i64: 2, 256>}, {pipeline_mode = #tpu.pipeline_mode<synchronous>, transform_indices = @transform_4, window_bounds = array<i64: 1, 256>}, {transform_indices = @transform_5, window_bounds = array<i64: 2, 256>}]} {
    %c0 = arith.constant 0 : index
    %c0_0 = arith.constant 0 : index
    %0 = vector.load %arg2[%c0, %c0_0] : memref<2x32xf32, #tpu.memory_space<vmem>>, vector<2x32xf32>
    %c0_1 = arith.constant 0 : index
    %c0_2 = arith.constant 0 : index
    %1 = vector.load %arg4[%c0_1, %c0_2] : memref<32x256xf32, #tpu.memory_space<vmem>>, vector<32x256xf32>
    %cst = arith.constant dense<0.000000e+00> : vector<2x256xf32>
    %2 = tpu.matmul %0, %1, %cst {dimension_numbers = #tpu.dot_dimension_numbers<[1], [0], [0], [1], [0, 0, 1, 1], [], []>} : vector<2x32xf32>, vector<32x256xf32>, vector<2x256xf32> -> vector<2x256xf32>
    %c0_3 = arith.constant 0 : index
    %c0_4 = arith.constant 0 : index
    %3 = vector.load %arg3[%c0_3, %c0_4] : memref<2x2xf32, #tpu.memory_space<vmem>>, vector<2x2xf32>
    %c0_5 = arith.constant 0 : index
    %c0_6 = arith.constant 0 : index
    %4 = vector.load %arg5[%c0_5, %c0_6] : memref<2x256xf32, #tpu.memory_space<vmem>>, vector<2x256xf32>
    %cst_7 = arith.constant dense<0.000000e+00> : vector<2x256xf32>
    %5 = tpu.matmul %3, %4, %cst_7 {dimension_numbers = #tpu.dot_dimension_numbers<[1], [0], [0], [1], [0, 0, 1, 1], [], []>} : vector<2x2xf32>, vector<2x256xf32>, vector<2x256xf32> -> vector<2x256xf32>
    %6 = arith.addf %2, %5 : vector<2x256xf32>
    %c0_8 = arith.constant 0 : index
    %c0_9 = arith.constant 0 : index
    %7 = vector.load %arg6[%c0_8, %c0_9] : memref<1x256xf32, #tpu.memory_space<vmem>>, vector<1x256xf32>
    %8 = vector.broadcast %7 : vector<1x256xf32> to vector<2x256xf32>
    %9 = arith.addf %6, %8 : vector<2x256xf32>
    %c0_10 = arith.constant 0 : index
    %c0_11 = arith.constant 0 : index
    %10 = vector.load %arg7[%c0_10, %c0_11] : memref<2x256xf32, #tpu.memory_space<vmem>>, vector<2x256xf32>
    tpu.vector_store %arg7[%c0_10, %c0_11], %9 {strides = array<i32>} : memref<2x256xf32, #tpu.memory_space<vmem>>, vector<2x256xf32>,
    return
  }
  func.func @transform_0(%arg0: i32, %arg1: i32) -> (i32, i32) {
    %c0_i32 = arith.constant 0 : i32
    return %arg0, %arg1 : i32, i32
  }
  func.func @transform_1(%arg0: i32, %arg1: i32) -> (i32, i32) {
    %c0_i32 = arith.constant 0 : i32
    %c0_i32_0 = arith.constant 0 : i32
    return %arg0, %c0_i32 : i32, i32
  }
  func.func @transform_2(%arg0: i32, %arg1: i32) -> (i32, i32) {
    %c0_i32 = arith.constant 0 : i32
    %c0_i32_0 = arith.constant 0 : i32
    %c0_i32_1 = arith.constant 0 : i32
    return %c0_i32, %c0_i32_0 : i32, i32
  }
  func.func @transform_3(%arg0: i32, %arg1: i32) -> (i32, i32) {
    %c0_i32 = arith.constant 0 : i32
    %c0_i32_0 = arith.constant 0 : i32
    %c0_i32_1 = arith.constant 0 : i32
    return %c0_i32, %c0_i32_0 : i32, i32
  }
  func.func @transform_4(%arg0: i32, %arg1: i32) -> (i32, i32) {
    %c0_i32 = arith.constant 0 : i32
    %c0_i32_0 = arith.constant 0 : i32
    %c0_i32_1 = arith.constant 0 : i32
    return %c0_i32, %c0_i32_0 : i32, i32
  }
  func.func @transform_5(%arg0: i32, %arg1: i32) -> (i32, i32) {
    %c0_i32 = arith.constant 0 : i32
    return %arg0, %arg1 : i32, i32
  }
}

</mosaic_0001>

<llo_original>
// kernel: tpu_custom_call.1
$region0: #{tpu_custom_call.1}
  #allocation0 [shape = 'u32[]', space=smem, size = 0x4, offset = 0x4, fixed_abs, tag = 'smem constant byte address 0x4 - core index']
  #allocation1 [shape = 'u32[144,128]{1,0:T(1,128)}', space=vmem, size = 0x12000, scoped, tag = 'internal scratch']
  %s0 = inlined_call_operand.hbm [shape: f32[2,32], index: 0, kind: input, shape index: {}]
  %s1 = inlined_call_operand.vmem [shape: f32[2,2], index: 1, kind: input, shape index: {}]
  %s2 = inlined_call_operand.hbm [shape: f32[32,256], index: 2, kind: input, shape index: {}]
  %s3 = inlined_call_operand.vmem [shape: f32[2,256], index: 3, kind: input, shape index: {}]
  %s4 = inlined_call_operand.vmem [shape: f32[1,256], index: 4, kind: input, shape index: {}]
  %s5 = inlined_call_operand.hbm [shape: f32[2,256], index: 5, kind: output, shape index: {}]
  %s6 = sld [smem:[#allocation0]]
  $region38: #{tpu_custom_call.1} parent=0
    _
  %s8 = ssub.s32 1, %s6
  %s9 = scalar_select 0, %s8, %s6
  $region1: #{tpu_custom_call.1} parent=0
    #allocation2 [shape = 'u8[1024]{0}', space=vmem, size = 0x400, scoped, tag = 'input window, operand 0, single buffered']
    #allocation3 [shape = 's32[1]{0}', space=sflag, size = 0x4, scoped, tag = 'scoped memory for tpu_custom_call.1']
    #allocation4 [shape = 's32[1]{0}', space=sflag, size = 0x4, scoped, tag = 'scoped memory for tpu_custom_call.1']
    #allocation5 [shape = 'u8[32768]{0}', space=vmem, size = 0x8000, scoped, tag = 'input window, operand 2, single buffered']
    #allocation6 [shape = 's32[1]{0}', space=sflag, size = 0x4, scoped, tag = 'scoped memory for tpu_custom_call.1']
    #allocation7 [shape = 'u8[2048]{0}', space=vmem, size = 0x800, scoped, tag = 'output window, operand 0, single buffered']
    %10 = vsyncpa [#allocation3], 0
    %11 = vsyncpa [#allocation6], 0
    %12 = vsyncpa [#allocation4], 0
    // Predicated region
    $region2: #{tpu_custom_call.1} parent=1 // pred_check
      _
    $region3: #{tpu_custom_call.1} parent=1 // pred_check_branch
      %14 = sbr.rel (0) target = $region5
    $region4: #{tpu_custom_call.1} parent=1 // pred_region
      %s16 = ssub.s32 32, 32
      %17 = vsyncadd [#allocation3], %s16
      %s19 = sshll.u32 [#allocation2], 4
      %s20 = int_to_ptr.vmem [resolvable:$true] %s19
      %22 = dma.hbm_to_vmem [thread:$0]  %s0, 32, %s20, [#allocation3]
    $region5: #{tpu_custom_call.1} parent=1 // pred_fallthru
      _
    // Predicated region
    $region6: #{tpu_custom_call.1} parent=1 // pred_check
      _
    $region7: #{tpu_custom_call.1} parent=1 // pred_check_branch
      %24 = sbr.rel (0) target = $region9
    $region8: #{tpu_custom_call.1} parent=1 // pred_region
      _
    $region9: #{tpu_custom_call.1} parent=1 // pred_fallthru
      _
    // Predicated region
    $region10: #{tpu_custom_call.1} parent=1 // pred_check
      _
    $region11: #{tpu_custom_call.1} parent=1 // pred_check_branch
      %26 = sbr.rel (0) target = $region13
    $region12: #{tpu_custom_call.1} parent=1 // pred_region
      %s28 = ssub.s32 1024, 1024
      %29 = vsyncadd [#allocation6], %s28
      %s30 = sshll.u32 [#allocation5], 4
      %s31 = int_to_ptr.vmem [resolvable:$true] %s30
      %36 = dma.hbm_to_vmem [thread:$0]  %s2, 1024, %s31, [#allocation6], 256, 256, 16
    $region13: #{tpu_custom_call.1} parent=1 // pred_fallthru
      _
    // Predicated region
    $region14: #{tpu_custom_call.1} parent=1 // pred_check
      _
    $region15: #{tpu_custom_call.1} parent=1 // pred_check_branch
      %38 = sbr.rel (0) target = $region17
    $region16: #{tpu_custom_call.1} parent=1 // pred_region
      _
    $region17: #{tpu_custom_call.1} parent=1 // pred_fallthru
      _
    // Predicated region
    $region18: #{tpu_custom_call.1} parent=1 // pred_check
      _
    $region19: #{tpu_custom_call.1} parent=1 // pred_check_branch
      %40 = sbr.rel (0) target = $region21
    $region20: #{tpu_custom_call.1} parent=1 // pred_region
      _
    $region21: #{tpu_custom_call.1} parent=1 // pred_fallthru
      _
    // Predicated region
    $region22: #{tpu_custom_call.1} parent=1 // pred_check
      _
    $region23: #{tpu_custom_call.1} parent=1 // pred_check_branch
      %42 = sbr.rel (0) target = $region25
    $region24: #{tpu_custom_call.1} parent=1 // pred_region
      %43 = dma.done [#allocation3], 32
    $region25: #{tpu_custom_call.1} parent=1 // pred_fallthru
      _
    // Predicated region
    $region26: #{tpu_custom_call.1} parent=1 // pred_check
      _
    $region27: #{tpu_custom_call.1} parent=1 // pred_check_branch
      %45 = sbr.rel (0) target = $region29
    $region28: #{tpu_custom_call.1} parent=1 // pred_region
      %46 = dma.done [#allocation6], 1024
    $region29: #{tpu_custom_call.1} parent=1 // pred_fallthru
      _
    %v47 = vld [vmem:[#allocation2] sm:$0x3]
    %v48 = vld [vmem:[#allocation5] sm:$0xff]
    %v49 = vld [vmem:[#allocation5 + $0x8] sm:$0xff]
    %v50 = vld [vmem:[#allocation5 + $0x10] sm:$0xff]
    %v51 = vld [vmem:[#allocation5 + $0x18] sm:$0xff]
    %v52 = vld [vmem:[#allocation5 + $0x20] sm:$0xff]
    %v53 = vld [vmem:[#allocation5 + $0x28] sm:$0xff]
    %v54 = vld [vmem:[#allocation5 + $0x30] sm:$0xff]
    %v55 = vld [vmem:[#allocation5 + $0x38] sm:$0xff]
    %v56 = vld [vmem:[%s1] sm:$0x3]
    %v57 = vld [vmem:[%s3] sm:$0xf]
    %v60 = vunpack.c.l.s4 1983009808
    %v61 = vunpack.c.0.s8 %v60
    %v62 = vlaneseq
    %v63 = vshrl.u32 %v62, 7
    %v64 = vsub.s32 %v61, %v63
    %v65 = vrot.slane %v57, %v64
    %v66 = vcombine.high %v65, %v65
    %vm67 = vcmask 15360
    %v69 = vsel %vm67, %v56, 0
    %vm71 = vcmask 1041408
    %v72 = vsel %vm71, %v65, 0
    %v74 = vsel %vm71, %v66, 0
    %76 = vmatprep.subr.mxu0 %v74
    %77 = vmatpush1.msra.mxu0 %v72
    %78 = vmatprep.subr.mxu0 0.0
    %79 = vmatpush1.msra.mxu0 0.0
    %80 = vmatprep.subr.mxu0 0.0
    %81 = vmatpush1.msra.mxu0 0.0
    %82 = vmatprep.subr.mxu0 0.0
    %83 = vmatpush1.msra.mxu0 0.0
    %84 = vmatprep.subr.mxu0 0.0
    %85 = vmatpush1.msra.mxu0 0.0
    %86 = vmatprep.subr.mxu0 0.0
    %87 = vmatpush1.msra.mxu0 0.0
    %88 = vmatprep.subr.mxu0 0.0
    %89 = vmatpush1.msra.mxu0 0.0
    %90 = vmatprep.subr.mxu0 0.0
    %91 = vmatpush1.msra.mxu0 0.0
    %92 = vmatprep.subr.mxu0 0.0
    %93 = vmatpush1.msra.mxu0 0.0
    %94 = vmatprep.subr.mxu0 0.0
    %95 = vmatpush1.msra.mxu0 0.0
    %96 = vmatprep.subr.mxu0 0.0
    %97 = vmatpush1.msra.mxu0 0.0
    %98 = vmatprep.subr.mxu0 0.0
    %99 = vmatpush1.msra.mxu0 0.0
    %100 = vmatprep.subr.mxu0 0.0
    %101 = vmatpush1.msra.mxu0 0.0
    %102 = vmatprep.subr.mxu0 0.0
    %103 = vmatpush1.msra.mxu0 0.0
    %104 = vmatprep.subr.mxu0 0.0
    %105 = vmatpush1.msra.mxu0 0.0
    %106 = vmatprep.subr.mxu0 0.0
    %107 = vmatpush1.msra.mxu0 0.0
    %108 = vmatprep.subr.mxu0 0.0
    %109 = vmatpush1.msra.mxu0 0.0
    %110 = vmatprep.subr.mxu0 0.0
    %111 = vmatpush1.msra.mxu0 0.0
    %112 = vmatprep.subr.mxu0 0.0
    %113 = vmatpush1.msra.mxu0 0.0
    %114 = vmatprep.subr.mxu0 0.0
    %115 = vmatpush1.msra.mxu0 0.0
    %116 = vmatprep.subr.mxu0 0.0
    %117 = vmatpush1.msra.mxu0 0.0
    %118 = vmatprep.subr.mxu0 0.0
    %119 = vmatpush1.msra.mxu0 0.0
    %120 = vmatprep.subr.mxu0 0.0
    %121 = vmatpush1.msra.mxu0 0.0
    %122 = vmatprep.subr.mxu0 0.0
    %123 = vmatpush1.msra.mxu0 0.0
    %124 = vmatprep.subr.mxu0 0.0
    %125 = vmatpush1.msra.mxu0 0.0
    %126 = vmatprep.subr.mxu0 0.0
    %127 = vmatpush1.msra.mxu0 0.0
    %128 = vmatprep.subr.mxu0 0.0
    %129 = vmatpush1.msra.mxu0 0.0
    %130 = vmatprep.subr.mxu0 0.0
    %131 = vmatpush1.msra.mxu0 0.0
    %132 = vmatprep.subr.mxu0 0.0
    %133 = vmatpush1.msra.mxu0 0.0
    %134 = vmatprep.subr.mxu0 0.0
    %135 = vmatpush1.msra.mxu0 0.0
    %136 = vmatprep.subr.mxu0 0.0
    %137 = vmatpush1.msra.mxu0 0.0
    %138 = vmatprep.subr.mxu0 0.0
    %139 = vmatpush1.msra.mxu0 0.0
    %140 = vmatprep.mubr.f32.mxu0 0.0
    %141 = vmatmul.mubr.f32.gmra.mrb[0].mxu0 %v69
    %v142 = vpop.f32.mrb[0].mxu0
    %v143 = vadd.f32 0.0, %v142
    %v144 = vpop.f32.mrb[0].mxu0
    %v145 = vadd.f32 0.0, %v144
    %146 = vdwg.mxu0
    %vm147 = vcmask 261120
    %v149 = vsel %vm147, %v47, 0
    %151 = vmatprep.subr.mxu0 %v49
    %152 = vmatpush1.msra.mxu0 %v48
    %153 = vmatprep.subr.mxu0 %v51
    %154 = vmatpush1.msra.mxu0 %v50
    %155 = vmatprep.subr.mxu0 %v53
    %156 = vmatpush1.msra.mxu0 %v52
    %157 = vmatprep.subr.mxu0 %v55
    %158 = vmatpush1.msra.mxu0 %v54
    %159 = vmatprep.subr.mxu0 0.0
    %160 = vmatpush1.msra.mxu0 0.0
    %161 = vmatprep.subr.mxu0 0.0
    %162 = vmatpush1.msra.mxu0 0.0
    %163 = vmatprep.subr.mxu0 0.0
    %164 = vmatpush1.msra.mxu0 0.0
    %165 = vmatprep.subr.mxu0 0.0
    %166 = vmatpush1.msra.mxu0 0.0
    %167 = vmatprep.subr.mxu0 0.0
    %168 = vmatpush1.msra.mxu0 0.0
    %169 = vmatprep.subr.mxu0 0.0
    %170 = vmatpush1.msra.mxu0 0.0
    %171 = vmatprep.subr.mxu0 0.0
    %172 = vmatpush1.msra.mxu0 0.0
    %173 = vmatprep.subr.mxu0 0.0
    %174 = vmatpush1.msra.mxu0 0.0
    %175 = vmatprep.subr.mxu0 0.0
    %176 = vmatpush1.msra.mxu0 0.0
    %177 = vmatprep.subr.mxu0 0.0
    %178 = vmatpush1.msra.mxu0 0.0
    %179 = vmatprep.subr.mxu0 0.0
    %180 = vmatpush1.msra.mxu0 0.0
    %181 = vmatprep.subr.mxu0 0.0
    %182 = vmatpush1.msra.mxu0 0.0
    %183 = vmatprep.subr.mxu0 0.0
    %184 = vmatpush1.msra.mxu0 0.0
    %185 = vmatprep.subr.mxu0 0.0
    %186 = vmatpush1.msra.mxu0 0.0
    %187 = vmatprep.subr.mxu0 0.0
    %188 = vmatpush1.msra.mxu0 0.0
    %189 = vmatprep.subr.mxu0 0.0
    %190 = vmatpush1.msra.mxu0 0.0
    %191 = vmatprep.subr.mxu0 0.0
    %192 = vmatpush1.msra.mxu0 0.0
    %193 = vmatprep.subr.mxu0 0.0
    %194 = vmatpush1.msra.mxu0 0.0
    %195 = vmatprep.subr.mxu0 0.0
    %196 = vmatpush1.msra.mxu0 0.0
    %197 = vmatprep.subr.mxu0 0.0
    %198 = vmatpush1.msra.mxu0 0.0
    %199 = vmatprep.subr.mxu0 0.0
    %200 = vmatpush1.msra.mxu0 0.0
    %201 = vmatprep.subr.mxu0 0.0
    %202 = vmatpush1.msra.mxu0 0.0
    %203 = vmatprep.subr.mxu0 0.0
    %204 = vmatpush1.msra.mxu0 0.0
    %205 = vmatprep.subr.mxu0 0.0
    %206 = vmatpush1.msra.mxu0 0.0
    %207 = vmatprep.subr.mxu0 0.0
    %208 = vmatpush1.msra.mxu0 0.0
    %209 = vmatprep.subr.mxu0 0.0
    %210 = vmatpush1.msra.mxu0 0.0
    %211 = vmatprep.subr.mxu0 0.0
    %212 = vmatpush1.msra.mxu0 0.0
    %213 = vmatprep.subr.mxu0 0.0
    %214 = vmatpush1.msra.mxu0 0.0
    %215 = vmatprep.mubr.f32.mxu0 0.0
    %216 = vmatmul.mubr.f32.gmra.mrb[0].mxu0 %v149
    %v217 = vpop.f32.mrb[0].mxu0
    %v218 = vadd.f32 %v143, %v217
    %v219 = vpop.f32.mrb[0].mxu0
    %v220 = vadd.f32 %v145, %v219
    %221 = vdwg.mxu0
    %v222 = vld [vmem:[%s4] sm:$0x3]
    %v224 = vlaneseq
    %v225 = vshrl.u32 %v224, 7
    %v226 = vsub.s32 0, %v225
    %v227 = vrot.slane %v222, %v226
    %v228 = vlaneseq
    %v229 = vshrl.u32 %v228, 7
    %v230 = vsub.s32 1, %v229
    %v231 = vrot.slane %v222, %v230
    %v234 = vadd.f32 %v218, %v227
    %v235 = vadd.f32 %v220, %v231
    %v238 = vcombine.low %v234, %v235
    %v240 = vunpack.c.l.s4 1983009808
    %v241 = vunpack.c.0.s8 %v240
    %v242 = vlaneseq
    %v243 = vshrl.u32 %v242, 7
    %v244 = vsub.s32 %v241, %v243
    %v245 = vrot.slane %v238, %v244
    %247 = vst [vmem:[#allocation7] sm:$0xf] %v245
    // Predicated region
    $region30: #{tpu_custom_call.1} parent=1 // pred_check
      _
    $region31: #{tpu_custom_call.1} parent=1 // pred_check_branch
      %249 = sbr.rel (0) target = $region33
    $region32: #{tpu_custom_call.1} parent=1 // pred_region
      %s251 = ssub.s32 64, 64
      %252 = vsyncadd [#allocation4], %s251
      %s254 = sshll.u32 [#allocation7], 4
      %s255 = int_to_ptr.vmem [resolvable:$true] %s254
      %257 = dma.vmem_to_hbm [thread:$0]  %s255, 64, %s5, [#allocation4]
    $region33: #{tpu_custom_call.1} parent=1 // pred_fallthru
      _
    // Predicated region
    $region34: #{tpu_custom_call.1} parent=1 // pred_check
      _
    $region35: #{tpu_custom_call.1} parent=1 // pred_check_branch
      %259 = sbr.rel (0) target = $region37
    $region36: #{tpu_custom_call.1} parent=1 // pred_region
      %260 = dma.done [#allocation4], 64
    $region37: #{tpu_custom_call.1} parent=1 // pred_fallthru
      _
    %261 = vsyncpa [#allocation3], 1
    %262 = vsyncpa [#allocation6], 1
    %263 = vsyncpa [#allocation4], 1

</llo_original>
